<compile_context>
chip_gen: v7x
topology: tpu7x:2x2x1
jax: 0.10.0
libtpu: 0.0.40
codegen_flags: <defaults>
</compile_context>

<pallas_src>
import jax
import jax.numpy as jnp
from jax.experimental import pallas as pl
from jax.experimental.pallas import tpu as pltpu

MAP_H, MAP_W = 10, 10
NB_FILTERS_3X3 = 32          # stand-in for config2.nb_filters_3x3
NB_FILTERS_POLICY = 2
FC_OUT = 570
BN_EPS = 1e-5


# ----------------------------------------------------------------------------
# Fused kernel: conv1x1 -> BatchNorm(batch stats) -> ReLU -> Linear -> Softmax
#
#   x_ref     : (B, C_in, HW)   NCHW with H,W flattened (free reshape)
#   wconv_ref : (2, C_in)       conv weight
#   bconv_ref : (2, 1)          conv bias
#   gamma_ref : (2, 1)          BN weight
#   beta_ref  : (2, 1)          BN bias
#   fcw0_ref  : (HW, 570)       fc weight slab for channel 0 (pre-transposed)
#   fcw1_ref  : (HW, 570)       fc weight slab for channel 1 (pre-transposed)
#   fcb_ref   : (1, 570)        fc bias
#   out_ref   : (B, 570)        softmax probabilities
#   y0_s,y1_s : (B, HW)         VMEM scratch: per-channel conv activations
# ----------------------------------------------------------------------------
def _make_policy_head_kernel(batch, hw, eps):
    def kernel(x_ref, wconv_ref, bconv_ref, gamma_ref, beta_ref,
               fcw0_ref, fcw1_ref, fcb_ref, out_ref, y0_s, y1_s):
        w = wconv_ref[...]                      # (2, C_in)
        bconv = bconv_ref[...]                  # (2, 1)

        # --- 1x1 conv as a lane-dense matmul per example (static unroll, tiny B)
        for b in range(batch):
            y = jnp.dot(w, x_ref[b], preferred_element_type=jnp.float32) + bconv  # (2, HW)
            y0_s[b:b + 1, :] = y[0:1, :]        # channel 0 row for example b
            y1_s[b:b + 1, :] = y[1:2, :]        # channel 1 row for example b

        n = float(batch * hw)

        # --- BatchNorm2d (training mode): per-channel stats over (B, H, W)
        def bn_relu(y_s, ch):
            y = y_s[...]                                                   # (B, HW)
            m = jnp.sum(jnp.sum(y, axis=1, keepdims=True),
                        axis=0, keepdims=True) / n                         # (1, 1)
            d = y - m
            v = jnp.sum(jnp.sum(d * d, axis=1, keepdims=True),
                        axis=0, keepdims=True) / n                         # biased var
            g = gamma_ref[ch:ch + 1, :]                                    # (1, 1)
            bt = beta_ref[ch:ch + 1, :]                                    # (1, 1)
            return jnp.maximum(d * jax.lax.rsqrt(v + eps) * g + bt, 0.0)   # (B, HW)

        a0 = bn_relu(y0_s, 0)
        a1 = bn_relu(y1_s, 1)

        # --- Linear (channel-major flatten folded into the two weight slabs)
        logits = (jnp.dot(a0, fcw0_ref[...], preferred_element_type=jnp.float32)
                  + jnp.dot(a1, fcw1_ref[...], preferred_element_type=jnp.float32)
                  + fcb_ref[...])                                          # (B, 570)

        # --- Softmax over dim=1
        mmax = jnp.max(logits, axis=-1, keepdims=True)
        e = jnp.exp(logits - mmax)
        denom = jnp.sum(e, axis=-1, keepdims=True)
        out_ref[...] = e * pl.reciprocal(denom, approx=False)

    return kernel


def policy_head_forward(x, kparams):
    """x: (B, C_in, 10, 10) float32, NCHW (same as PyTorch). kparams: prepare_params(...)."""
    B, C_in, H, W = x.shape
    hw = H * W
    x3 = x.reshape(B, C_in, hw)                 # pure view reshape, no transpose

    kernel = _make_policy_head_kernel(B, hw, BN_EPS)
    vmem_specs = [pl.BlockSpec(memory_space=pltpu.MemorySpace.VMEM) for _ in range(8)]

    return pl.pallas_call(
        kernel,
        out_shape=jax.ShapeDtypeStruct((B, FC_OUT), jnp.float32),
        in_specs=vmem_specs,
        out_specs=pl.BlockSpec(memory_space=pltpu.MemorySpace.VMEM),
        scratch_shapes=[pltpu.VMEM((B, hw), jnp.float32),
                        pltpu.VMEM((B, hw), jnp.float32)],
    )(x3, kparams["wconv"], kparams["bconv"], kparams["gamma"], kparams["beta"],
      kparams["fcw0"], kparams["fcw1"], kparams["fcb"])


def prepare_params(params):
    """One-time conversion of PyTorch-layout params into kernel layout
    (done outside the forward so no per-call HBM transposes)."""
    conv_w, conv_b, bn_gamma, bn_beta, fc_w, fc_b = params
    hw = MAP_H * MAP_W
    return {
        "wconv": conv_w.reshape(NB_FILTERS_POLICY, -1).astype(jnp.float32),   # (2, C_in)
        "bconv": conv_b.reshape(NB_FILTERS_POLICY, 1),
        "gamma": bn_gamma.reshape(NB_FILTERS_POLICY, 1),
        "beta": bn_beta.reshape(NB_FILTERS_POLICY, 1),
        # fc_w is (570, 2*HW) with channel-major in_features; split + transpose once.
        "fcw0": jnp.asarray(fc_w[:, 0:hw].T),          # (HW, 570)
        "fcw1": jnp.asarray(fc_w[:, hw:2 * hw].T),     # (HW, 570)
        "fcb": fc_b.reshape(1, FC_OUT),
    }


def init_params(key, c_in):
    k1, k2, k3, k4 = jax.random.split(key, 4)
    # deterministic synthetic init (PyTorch-like small uniform for conv/fc,
    # BN defaults: weight=1, bias=0)
    conv_w = jax.random.uniform(k1, (NB_FILTERS_POLICY, c_in), jnp.float32, -0.1, 0.1)
    conv_b = jax.random.uniform(k2, (NB_FILTERS_POLICY,), jnp.float32, -0.1, 0.1)
    bn_gamma = jnp.ones((NB_FILTERS_POLICY,), jnp.float32)
    bn_beta = jnp.zeros((NB_FILTERS_POLICY,), jnp.float32)
    fc_in = NB_FILTERS_POLICY * MAP_H * MAP_W
    fc_w = jax.random.uniform(k3, (FC_OUT, fc_in), jnp.float32, -0.05, 0.05)
    fc_b = jax.random.uniform(k4, (FC_OUT,), jnp.float32, -0.05, 0.05)
    return conv_w, conv_b, bn_gamma, bn_beta, fc_w, fc_b


def reference_forward(x, params):
    """Pure-JAX reference mirroring the PyTorch forward (training-mode BN)."""
    conv_w, conv_b, bn_gamma, bn_beta, fc_w, fc_b = params
    out = jnp.einsum("oc,bchw->bohw", conv_w, x) + conv_b[None, :, None, None]
    mean = jnp.mean(out, axis=(0, 2, 3), keepdims=True)
    var = jnp.mean((out - mean) ** 2, axis=(0, 2, 3), keepdims=True)
    out = (out - mean) * jax.lax.rsqrt(var + BN_EPS)
    out = out * bn_gamma[None, :, None, None] + bn_beta[None, :, None, None]
    out = jnp.maximum(out, 0.0)
    flat = out.reshape(out.shape[0], -1)
    logits = flat @ fc_w.T + fc_b
    return jax.nn.softmax(logits, axis=1)


if __name__ == "__main__":
    key = jax.random.PRNGKey(0)
    kx, kp = jax.random.split(key)

    B = 2
    x = jax.random.normal(kx, (B, NB_FILTERS_3X3, MAP_H, MAP_W), jnp.float32)
    params = init_params(kp, NB_FILTERS_3X3)
    kparams = prepare_params(params)          # weight layout prep done ONCE

    out = policy_head_forward(x, kparams)
    out = jax.block_until_ready(out)

    ref = reference_forward(x, params)
    assert out.shape == (B, FC_OUT)
    assert jnp.allclose(out, ref, atol=1e-5, rtol=1e-5), "mismatch vs reference"

    print("KERNEL_OK")
</pallas_src>

<mosaic_0001>
module attributes {stable_mosaic.version = 11 : i64} {
  func.func @kernel(%arg0: memref<2x32x100xf32, #tpu.memory_space<vmem>>, %arg1: memref<2x32xf32, #tpu.memory_space<vmem>>, %arg2: memref<2x1xf32, #tpu.memory_space<vmem>>, %arg3: memref<2x1xf32, #tpu.memory_space<vmem>>, %arg4: memref<2x1xf32, #tpu.memory_space<vmem>>, %arg5: memref<100x570xf32, #tpu.memory_space<vmem>>, %arg6: memref<100x570xf32, #tpu.memory_space<vmem>>, %arg7: memref<1x570xf32, #tpu.memory_space<vmem>>, %arg8: memref<2x570xf32, #tpu.memory_space<vmem>>, %arg9: memref<2x100xf32, #tpu.memory_space<vmem>>, %arg10: memref<2x100xf32, #tpu.memory_space<vmem>>) attributes {dimension_semantics = [], scalar_prefetch = 0 : i64, scratch_operands = 2 : i64, tpu.core_type = #tpu.core_type<tc>} {
    %c0 = arith.constant 0 : index
    %c0_0 = arith.constant 0 : index
    %0 = vector.load %arg1[%c0, %c0_0] : memref<2x32xf32, #tpu.memory_space<vmem>>, vector<2x32xf32>
    %c0_1 = arith.constant 0 : index
    %c0_2 = arith.constant 0 : index
    %1 = vector.load %arg2[%c0_1, %c0_2] : memref<2x1xf32, #tpu.memory_space<vmem>>, vector<2x1xf32>
    %c0_3 = arith.constant 0 : index
    %c0_4 = arith.constant 0 : index
    %c0_5 = arith.constant 0 : index
    %2 = vector.load %arg0[%c0_3, %c0_4, %c0_5] : memref<2x32x100xf32, #tpu.memory_space<vmem>>, vector<1x32x100xf32>
    %3 = vector.shape_cast %2 : vector<1x32x100xf32> to vector<32x100xf32>
    %cst = arith.constant dense<0.000000e+00> : vector<2x100xf32>
    %4 = tpu.matmul %0, %3, %cst {dimension_numbers = #tpu.dot_dimension_numbers<[1], [0], [0], [1], [0, 0, 1, 1], [], []>} : vector<2x32xf32>, vector<32x100xf32>, vector<2x100xf32> -> vector<2x100xf32>
    %5 = vector.broadcast %1 : vector<2x1xf32> to vector<2x100xf32>
    %6 = arith.addf %4, %5 : vector<2x100xf32>
    %7 = vector.extract_strided_slice %6 {offsets = [0, 0], sizes = [1, 100], strides = [1, 1]} : vector<2x100xf32> to vector<1x100xf32>
    %c0_6 = arith.constant 0 : index
    %c0_7 = arith.constant 0 : index
    %8 = vector.load %arg9[%c0_6, %c0_7] : memref<2x100xf32, #tpu.memory_space<vmem>>, vector<1x100xf32>
    tpu.vector_store %arg9[%c0_6, %c0_7], %7 {strides = array<i32>} : memref<2x100xf32, #tpu.memory_space<vmem>>, vector<1x100xf32>,
    %9 = vector.extract_strided_slice %6 {offsets = [1, 0], sizes = [1, 100], strides = [1, 1]} : vector<2x100xf32> to vector<1x100xf32>
    %c0_8 = arith.constant 0 : index
    %c0_9 = arith.constant 0 : index
    %10 = vector.load %arg10[%c0_8, %c0_9] : memref<2x100xf32, #tpu.memory_space<vmem>>, vector<1x100xf32>
    tpu.vector_store %arg10[%c0_8, %c0_9], %9 {strides = array<i32>} : memref<2x100xf32, #tpu.memory_space<vmem>>, vector<1x100xf32>,
    %c1 = arith.constant 1 : index
    %c0_10 = arith.constant 0 : index
    %c0_11 = arith.constant 0 : index
    %11 = vector.load %arg0[%c1, %c0_10, %c0_11] : memref<2x32x100xf32, #tpu.memory_space<vmem>>, vector<1x32x100xf32>
    %12 = vector.shape_cast %11 : vector<1x32x100xf32> to vector<32x100xf32>
    %cst_12 = arith.constant dense<0.000000e+00> : vector<2x100xf32>
    %13 = tpu.matmul %0, %12, %cst_12 {dimension_numbers = #tpu.dot_dimension_numbers<[1], [0], [0], [1], [0, 0, 1, 1], [], []>} : vector<2x32xf32>, vector<32x100xf32>, vector<2x100xf32> -> vector<2x100xf32>
    %14 = vector.broadcast %1 : vector<2x1xf32> to vector<2x100xf32>
    %15 = arith.addf %13, %14 : vector<2x100xf32>
    %16 = vector.extract_strided_slice %15 {offsets = [0, 0], sizes = [1, 100], strides = [1, 1]} : vector<2x100xf32> to vector<1x100xf32>
    %c1_13 = arith.constant 1 : index
    %c0_14 = arith.constant 0 : index
    %17 = vector.load %arg9[%c1_13, %c0_14] : memref<2x100xf32, #tpu.memory_space<vmem>>, vector<1x100xf32>
    tpu.vector_store %arg9[%c1_13, %c0_14], %16 {strides = array<i32>} : memref<2x100xf32, #tpu.memory_space<vmem>>, vector<1x100xf32>,
    %18 = vector.extract_strided_slice %15 {offsets = [1, 0], sizes = [1, 100], strides = [1, 1]} : vector<2x100xf32> to vector<1x100xf32>
    %c1_15 = arith.constant 1 : index
    %c0_16 = arith.constant 0 : index
    %19 = vector.load %arg10[%c1_15, %c0_16] : memref<2x100xf32, #tpu.memory_space<vmem>>, vector<1x100xf32>
    tpu.vector_store %arg10[%c1_15, %c0_16], %18 {strides = array<i32>} : memref<2x100xf32, #tpu.memory_space<vmem>>, vector<1x100xf32>,
    %c0_17 = arith.constant 0 : index
    %c0_18 = arith.constant 0 : index
    %20 = vector.load %arg9[%c0_17, %c0_18] : memref<2x100xf32, #tpu.memory_space<vmem>>, vector<2x100xf32>
    %cst_19 = arith.constant dense<0.000000e+00> : vector<2xf32>
    %21 = vector.multi_reduction <add>, %20, %cst_19 [1] : vector<2x100xf32> to vector<2xf32>
    %22 = vector.shape_cast %21 : vector<2xf32> to vector<2x1xf32>
    %cst_20 = arith.constant dense<0.000000e+00> : vector<1xf32>
    %23 = vector.multi_reduction <add>, %22, %cst_20 [0] : vector<2x1xf32> to vector<1xf32>
    %24 = vector.shape_cast %23 : vector<1xf32> to vector<1x1xf32>
    %cst_21 = arith.constant 2.000000e+02 : f32
    %25 = vector.broadcast %cst_21 : f32 to vector<1x1xf32>
    %26 = arith.divf %24, %25 : vector<1x1xf32>
    %27 = vector.broadcast %26 : vector<1x1xf32> to vector<2x100xf32>
    %28 = arith.subf %20, %27 : vector<2x100xf32>
    %29 = arith.mulf %28, %28 : vector<2x100xf32>
    %cst_22 = arith.constant dense<0.000000e+00> : vector<2xf32>
    %30 = vector.multi_reduction <add>, %29, %cst_22 [1] : vector<2x100xf32> to vector<2xf32>
    %31 = vector.shape_cast %30 : vector<2xf32> to vector<2x1xf32>
    %cst_23 = arith.constant dense<0.000000e+00> : vector<1xf32>
    %32 = vector.multi_reduction <add>, %31, %cst_23 [0] : vector<2x1xf32> to vector<1xf32>
    %33 = vector.shape_cast %32 : vector<1xf32> to vector<1x1xf32>
    %cst_24 = arith.constant 2.000000e+02 : f32
    %34 = vector.broadcast %cst_24 : f32 to vector<1x1xf32>
    %35 = arith.divf %33, %34 : vector<1x1xf32>
    %c0_25 = arith.constant 0 : index
    %c0_26 = arith.constant 0 : index
    %36 = vector.load %arg3[%c0_25, %c0_26] : memref<2x1xf32, #tpu.memory_space<vmem>>, vector<1x1xf32>
    %c0_27 = arith.constant 0 : index
    %c0_28 = arith.constant 0 : index
    %37 = vector.load %arg4[%c0_27, %c0_28] : memref<2x1xf32, #tpu.memory_space<vmem>>, vector<1x1xf32>
    %cst_29 = arith.constant 9.99999974E-6 : f32
    %38 = vector.broadcast %cst_29 : f32 to vector<1x1xf32>
    %39 = arith.addf %35, %38 : vector<1x1xf32>
    %40 = math.rsqrt %39 : vector<1x1xf32>
    %41 = vector.broadcast %40 : vector<1x1xf32> to vector<2x100xf32>
    %42 = arith.mulf %28, %41 : vector<2x100xf32>
    %43 = vector.broadcast %36 : vector<1x1xf32> to vector<2x100xf32>
    %44 = arith.mulf %42, %43 : vector<2x100xf32>
    %45 = vector.broadcast %37 : vector<1x1xf32> to vector<2x100xf32>
    %46 = arith.addf %44, %45 : vector<2x100xf32>
    %cst_30 = arith.constant 0.000000e+00 : f32
    %47 = vector.broadcast %cst_30 : f32 to vector<2x100xf32>
    %48 = arith.maximumf %46, %47 : vector<2x100xf32>
    %c0_31 = arith.constant 0 : index
    %c0_32 = arith.constant 0 : index
    %49 = vector.load %arg10[%c0_31, %c0_32] : memref<2x100xf32, #tpu.memory_space<vmem>>, vector<2x100xf32>
    %cst_33 = arith.constant dense<0.000000e+00> : vector<2xf32>
    %50 = vector.multi_reduction <add>, %49, %cst_33 [1] : vector<2x100xf32> to vector<2xf32>
    %51 = vector.shape_cast %50 : vector<2xf32> to vector<2x1xf32>
    %cst_34 = arith.constant dense<0.000000e+00> : vector<1xf32>
    %52 = vector.multi_reduction <add>, %51, %cst_34 [0] : vector<2x1xf32> to vector<1xf32>
    %53 = vector.shape_cast %52 : vector<1xf32> to vector<1x1xf32>
    %cst_35 = arith.constant 2.000000e+02 : f32
    %54 = vector.broadcast %cst_35 : f32 to vector<1x1xf32>
    %55 = arith.divf %53, %54 : vector<1x1xf32>
    %56 = vector.broadcast %55 : vector<1x1xf32> to vector<2x100xf32>
    %57 = arith.subf %49, %56 : vector<2x100xf32>
    %58 = arith.mulf %57, %57 : vector<2x100xf32>
    %cst_36 = arith.constant dense<0.000000e+00> : vector<2xf32>
    %59 = vector.multi_reduction <add>, %58, %cst_36 [1] : vector<2x100xf32> to vector<2xf32>
    %60 = vector.shape_cast %59 : vector<2xf32> to vector<2x1xf32>
    %cst_37 = arith.constant dense<0.000000e+00> : vector<1xf32>
    %61 = vector.multi_reduction <add>, %60, %cst_37 [0] : vector<2x1xf32> to vector<1xf32>
    %62 = vector.shape_cast %61 : vector<1xf32> to vector<1x1xf32>
    %cst_38 = arith.constant 2.000000e+02 : f32
    %63 = vector.broadcast %cst_38 : f32 to vector<1x1xf32>
    %64 = arith.divf %62, %63 : vector<1x1xf32>
    %c1_39 = arith.constant 1 : index
    %c0_40 = arith.constant 0 : index
    %65 = vector.load %arg3[%c1_39, %c0_40] : memref<2x1xf32, #tpu.memory_space<vmem>>, vector<1x1xf32>
    %c1_41 = arith.constant 1 : index
    %c0_42 = arith.constant 0 : index
    %66 = vector.load %arg4[%c1_41, %c0_42] : memref<2x1xf32, #tpu.memory_space<vmem>>, vector<1x1xf32>
    %cst_43 = arith.constant 9.99999974E-6 : f32
    %67 = vector.broadcast %cst_43 : f32 to vector<1x1xf32>
    %68 = arith.addf %64, %67 : vector<1x1xf32>
    %69 = math.rsqrt %68 : vector<1x1xf32>
    %70 = vector.broadcast %69 : vector<1x1xf32> to vector<2x100xf32>
    %71 = arith.mulf %57, %70 : vector<2x100xf32>
    %72 = vector.broadcast %65 : vector<1x1xf32> to vector<2x100xf32>
    %73 = arith.mulf %71, %72 : vector<2x100xf32>
    %74 = vector.broadcast %66 : vector<1x1xf32> to vector<2x100xf32>
    %75 = arith.addf %73, %74 : vector<2x100xf32>
    %cst_44 = arith.constant 0.000000e+00 : f32
    %76 = vector.broadcast %cst_44 : f32 to vector<2x100xf32>
    %77 = arith.maximumf %75, %76 : vector<2x100xf32>
    %c0_45 = arith.constant 0 : index
    %c0_46 = arith.constant 0 : index
    %78 = vector.load %arg5[%c0_45, %c0_46] : memref<100x570xf32, #tpu.memory_space<vmem>>, vector<100x570xf32>
    %cst_47 = arith.constant dense<0.000000e+00> : vector<2x570xf32>
    %79 = tpu.matmul %48, %78, %cst_47 {dimension_numbers = #tpu.dot_dimension_numbers<[1], [0], [0], [1], [0, 0, 1, 1], [], []>} : vector<2x100xf32>, vector<100x570xf32>, vector<2x570xf32> -> vector<2x570xf32>
    %c0_48 = arith.constant 0 : index
    %c0_49 = arith.constant 0 : index
    %80 = vector.load %arg6[%c0_48, %c0_49] : memref<100x570xf32, #tpu.memory_space<vmem>>, vector<100x570xf32>
    %cst_50 = arith.constant dense<0.000000e+00> : vector<2x570xf32>
    %81 = tpu.matmul %77, %80, %cst_50 {dimension_numbers = #tpu.dot_dimension_numbers<[1], [0], [0], [1], [0, 0, 1, 1], [], []>} : vector<2x100xf32>, vector<100x570xf32>, vector<2x570xf32> -> vector<2x570xf32>
    %82 = arith.addf %79, %81 : vector<2x570xf32>
    %c0_51 = arith.constant 0 : index
    %c0_52 = arith.constant 0 : index
    %83 = vector.load %arg7[%c0_51, %c0_52] : memref<1x570xf32, #tpu.memory_space<vmem>>, vector<1x570xf32>
    %84 = vector.broadcast %83 : vector<1x570xf32> to vector<2x570xf32>
    %85 = arith.addf %82, %84 : vector<2x570xf32>
    %cst_53 = arith.constant dense<0xFF800000> : vector<2xf32>
    %86 = vector.multi_reduction <maximumf>, %85, %cst_53 [1] : vector<2x570xf32> to vector<2xf32>
    %87 = vector.shape_cast %86 : vector<2xf32> to vector<2x1xf32>
    %88 = vector.broadcast %87 : vector<2x1xf32> to vector<2x570xf32>
    %89 = arith.subf %85, %88 : vector<2x570xf32>
    %90 = math.exp %89 : vector<2x570xf32>
    %cst_54 = arith.constant dense<0.000000e+00> : vector<2xf32>
    %91 = vector.multi_reduction <add>, %90, %cst_54 [1] : vector<2x570xf32> to vector<2xf32>
    %92 = vector.shape_cast %91 : vector<2xf32> to vector<2x1xf32>
    %93 = tpu.reciprocal %92 : vector<2x1xf32> -> vector<2x1xf32>
    %94 = vector.broadcast %93 : vector<2x1xf32> to vector<2x570xf32>
    %95 = arith.mulf %90, %94 : vector<2x570xf32>
    %c0_55 = arith.constant 0 : index
    %c0_56 = arith.constant 0 : index
    %96 = vector.load %arg8[%c0_55, %c0_56] : memref<2x570xf32, #tpu.memory_space<vmem>>, vector<2x570xf32>
    tpu.vector_store %arg8[%c0_55, %c0_56], %95 {strides = array<i32>} : memref<2x570xf32, #tpu.memory_space<vmem>>, vector<2x570xf32>,
    return
  }
}

</mosaic_0001>

<llo_original>
// kernel: tpu_custom_call.1
$region0: #{tpu_custom_call.1}
  #allocation0 [shape = 'u32[]', space=smem, size = 0x4, offset = 0x4, fixed_abs, tag = 'smem constant byte address 0x4 - core index']
  #allocation1 [shape = 'u32[144,128]{1,0:T(1,128)}', space=vmem, size = 0x12000, scoped, tag = 'internal scratch']
  #allocation2 [shape = 'f32[2,100]{1,0:T(2,128)}', space=vmem, size = 0x400, scoped, tag = 'scratch operand']
  #allocation3 [shape = 'f32[2,100]{1,0:T(2,128)}', space=vmem, size = 0x400, scoped, tag = 'scratch operand']
  %s0 = inlined_call_operand.hbm [shape: f32[2,32,100], index: 0, kind: input, shape index: {}]
  %s1 = inlined_call_operand.vmem [shape: f32[2,32], index: 1, kind: input, shape index: {}]
  %s2 = inlined_call_operand.vmem [shape: f32[2,1], index: 2, kind: input, shape index: {}]
  %s3 = inlined_call_operand.vmem [shape: f32[2,1], index: 3, kind: input, shape index: {}]
  %s4 = inlined_call_operand.vmem [shape: f32[2,1], index: 4, kind: input, shape index: {}]
  %s5 = inlined_call_operand.hbm [shape: f32[100,570], index: 5, kind: input, shape index: {}]
  %s6 = inlined_call_operand.hbm [shape: f32[100,570], index: 6, kind: input, shape index: {}]
  %s7 = inlined_call_operand.vmem [shape: f32[1,570], index: 7, kind: input, shape index: {}]
  %s8 = inlined_call_operand.hbm [shape: f32[2,570], index: 8, kind: output, shape index: {}]
  %s9 = sld [smem:[#allocation0]]
  $region54: #{tpu_custom_call.1} parent=0
    _
  %s11 = ssub.s32 1, %s9
  %s12 = scalar_select 0, %s11, %s9
  $region1: #{tpu_custom_call.1} parent=0
    #allocation4 [shape = 'u8[32768]{0}', space=vmem, size = 0x8000, scoped, tag = 'input window, operand 0, single buffered']
    #allocation5 [shape = 's32[1]{0}', space=sflag, size = 0x4, scoped, tag = 'scoped memory for tpu_custom_call.1']
    #allocation6 [shape = 's32[1]{0}', space=sflag, size = 0x4, scoped, tag = 'scoped memory for tpu_custom_call.1']
    #allocation7 [shape = 'u8[266240]{0}', space=vmem, size = 0x41000, scoped, tag = 'input window, operand 5, single buffered']
    #allocation8 [shape = 's32[1]{0}', space=sflag, size = 0x4, scoped, tag = 'scoped memory for tpu_custom_call.1']
    #allocation9 [shape = 'u8[266240]{0}', space=vmem, size = 0x41000, scoped, tag = 'input window, operand 6, single buffered']
    #allocation10 [shape = 'u8[5120]{0}', space=vmem, size = 0x1400, scoped, tag = 'output window, operand 0, single buffered']
    %13 = vsyncpa [#allocation5], 0
    %14 = vsyncpa [#allocation8], 0
    %15 = vsyncpa [#allocation6], 0
    // Predicated region
    $region2: #{tpu_custom_call.1} parent=1 // pred_check
      _
    $region3: #{tpu_custom_call.1} parent=1 // pred_check_branch
      %17 = sbr.rel (0) target = $region5
    $region4: #{tpu_custom_call.1} parent=1 // pred_region
      %s19 = ssub.s32 1024, 1024
      %20 = vsyncadd [#allocation5], %s19
      %s21 = sshll.u32 [#allocation4], 4
      %s22 = int_to_ptr.vmem [resolvable:$true] %s21
      %27 = dma.hbm_to_vmem [thread:$0]  %s0, 1024, %s22, [#allocation5], 128, 128, 8
    $region5: #{tpu_custom_call.1} parent=1 // pred_fallthru
      _
    // Predicated region
    $region6: #{tpu_custom_call.1} parent=1 // pred_check
      _
    $region7: #{tpu_custom_call.1} parent=1 // pred_check_branch
      %29 = sbr.rel (0) target = $region9
    $region8: #{tpu_custom_call.1} parent=1 // pred_region
      _
    $region9: #{tpu_custom_call.1} parent=1 // pred_fallthru
      _
    // Predicated region
    $region10: #{tpu_custom_call.1} parent=1 // pred_check
      _
    $region11: #{tpu_custom_call.1} parent=1 // pred_check_branch
      %31 = sbr.rel (0) target = $region13
    $region12: #{tpu_custom_call.1} parent=1 // pred_region
      _
    $region13: #{tpu_custom_call.1} parent=1 // pred_fallthru
      _
    // Predicated region
    $region14: #{tpu_custom_call.1} parent=1 // pred_check
      _
    $region15: #{tpu_custom_call.1} parent=1 // pred_check_branch
      %33 = sbr.rel (0) target = $region17
    $region16: #{tpu_custom_call.1} parent=1 // pred_region
      _
    $region17: #{tpu_custom_call.1} parent=1 // pred_fallthru
      _
    // Predicated region
    $region18: #{tpu_custom_call.1} parent=1 // pred_check
      _
    $region19: #{tpu_custom_call.1} parent=1 // pred_check_branch
      %35 = sbr.rel (0) target = $region21
    $region20: #{tpu_custom_call.1} parent=1 // pred_region
      _
    $region21: #{tpu_custom_call.1} parent=1 // pred_fallthru
      _
    // Predicated region
    $region22: #{tpu_custom_call.1} parent=1 // pred_check
      _
    $region23: #{tpu_custom_call.1} parent=1 // pred_check_branch
      %37 = sbr.rel (0) target = $region25
    $region24: #{tpu_custom_call.1} parent=1 // pred_region
      %s39 = ssub.s32 8320, 8320
      %40 = vsyncadd [#allocation8], %s39
      %s41 = sshll.u32 [#allocation7], 4
      %s42 = int_to_ptr.vmem [resolvable:$true] %s41
      %47 = dma.hbm_to_vmem [thread:$0]  %s5, 8320, %s42, [#allocation8], 640, 640, 40
    $region25: #{tpu_custom_call.1} parent=1 // pred_fallthru
      _
    // Predicated region
    $region26: #{tpu_custom_call.1} parent=1 // pred_check
      _
    $region27: #{tpu_custom_call.1} parent=1 // pred_check_branch
      %49 = sbr.rel (0) target = $region29
    $region28: #{tpu_custom_call.1} parent=1 // pred_region
      %s51 = ssub.s32 8320, 8320
      %52 = vsyncadd [#allocation8], %s51
      %s53 = sshll.u32 [#allocation9], 4
      %s54 = int_to_ptr.vmem [resolvable:$true] %s53
      %59 = dma.hbm_to_vmem [thread:$0]  %s6, 8320, %s54, [#allocation8], 640, 640, 40
    $region29: #{tpu_custom_call.1} parent=1 // pred_fallthru
      _
    // Predicated region
    $region30: #{tpu_custom_call.1} parent=1 // pred_check
      _
    $region31: #{tpu_custom_call.1} parent=1 // pred_check_branch
      %61 = sbr.rel (0) target = $region33
    $region32: #{tpu_custom_call.1} parent=1 // pred_region
      _
    $region33: #{tpu_custom_call.1} parent=1 // pred_fallthru
      _
    // Predicated region
    $region34: #{tpu_custom_call.1} parent=1 // pred_check
      _
    $region35: #{tpu_custom_call.1} parent=1 // pred_check_branch
      %63 = sbr.rel (0) target = $region37
    $region36: #{tpu_custom_call.1} parent=1 // pred_region
      %64 = dma.done [#allocation5], 1024
    $region37: #{tpu_custom_call.1} parent=1 // pred_fallthru
      _
    // Predicated region
    $region38: #{tpu_custom_call.1} parent=1 // pred_check
      _
    $region39: #{tpu_custom_call.1} parent=1 // pred_check_branch
      %66 = sbr.rel (0) target = $region41
    $region40: #{tpu_custom_call.1} parent=1 // pred_region
      %67 = dma.done [#allocation8], 8320
    $region41: #{tpu_custom_call.1} parent=1 // pred_fallthru
      _
    // Predicated region
    $region42: #{tpu_custom_call.1} parent=1 // pred_check
      _
    $region43: #{tpu_custom_call.1} parent=1 // pred_check_branch
      %69 = sbr.rel (0) target = $region45
    $region44: #{tpu_custom_call.1} parent=1 // pred_region
      %70 = dma.done [#allocation8], 8320
    $region45: #{tpu_custom_call.1} parent=1 // pred_fallthru
      _
    %v71 = vld [vmem:[%s1] sm:$0x3]
    %v72 = vld [vmem:[%s2] sm:$0x3]
    %v73 = vld [vmem:[#allocation4] sm:$0xff]
    %v74 = vld [vmem:[#allocation4 + $0x8] sm:$0xff]
    %v75 = vld [vmem:[#allocation4 + $0x10] sm:$0xff]
    %v76 = vld [vmem:[#allocation4 + $0x18] sm:$0xff]
    %78 = vset.pattern.permute.xlu0 0
    %79 = vperm.xlu0 %78, %v72
    %v80 = vpop.permute.xlu0 %79
    %vm82 = vcmask 261120
    %v84 = vsel %vm82, %v71, 0
    %86 = vmatprep.subr.mxu0 0.0
    %87 = vmatpush1.msra.mxu0 %v73
    %88 = vmatprep.subr.mxu0 0.0
    %89 = vmatpush1.msra.mxu0 %v74
    %90 = vmatprep.subr.mxu0 0.0
    %91 = vmatpush1.msra.mxu0 %v75
    %92 = vmatprep.subr.mxu0 0.0
    %93 = vmatpush1.msra.mxu0 %v76
    %94 = vmatprep.subr.mxu0 0.0
    %95 = vmatpush1.msra.mxu0 0.0
    %96 = vmatprep.subr.mxu0 0.0
    %97 = vmatpush1.msra.mxu0 0.0
    %98 = vmatprep.subr.mxu0 0.0
    %99 = vmatpush1.msra.mxu0 0.0
    %100 = vmatprep.subr.mxu0 0.0
    %101 = vmatpush1.msra.mxu0 0.0
    %102 = vmatprep.subr.mxu0 0.0
    %103 = vmatpush1.msra.mxu0 0.0
    %104 = vmatprep.subr.mxu0 0.0
    %105 = vmatpush1.msra.mxu0 0.0
    %106 = vmatprep.subr.mxu0 0.0
    %107 = vmatpush1.msra.mxu0 0.0
    %108 = vmatprep.subr.mxu0 0.0
    %109 = vmatpush1.msra.mxu0 0.0
    %110 = vmatprep.subr.mxu0 0.0
    %111 = vmatpush1.msra.mxu0 0.0
    %112 = vmatprep.subr.mxu0 0.0
    %113 = vmatpush1.msra.mxu0 0.0
    %114 = vmatprep.subr.mxu0 0.0
    %115 = vmatpush1.msra.mxu0 0.0
    %116 = vmatprep.subr.mxu0 0.0
    %117 = vmatpush1.msra.mxu0 0.0
    %118 = vmatprep.subr.mxu0 0.0
    %119 = vmatpush1.msra.mxu0 0.0
    %120 = vmatprep.subr.mxu0 0.0
    %121 = vmatpush1.msra.mxu0 0.0
    %122 = vmatprep.subr.mxu0 0.0
    %123 = vmatpush1.msra.mxu0 0.0
    %124 = vmatprep.subr.mxu0 0.0
    %125 = vmatpush1.msra.mxu0 0.0
    %126 = vmatprep.subr.mxu0 0.0
    %127 = vmatpush1.msra.mxu0 0.0
    %128 = vmatprep.subr.mxu0 0.0
    %129 = vmatpush1.msra.mxu0 0.0
    %130 = vmatprep.subr.mxu0 0.0
    %131 = vmatpush1.msra.mxu0 0.0
    %132 = vmatprep.subr.mxu0 0.0
    %133 = vmatpush1.msra.mxu0 0.0
    %134 = vmatprep.subr.mxu0 0.0
    %135 = vmatpush1.msra.mxu0 0.0
    %136 = vmatprep.subr.mxu0 0.0
    %137 = vmatpush1.msra.mxu0 0.0
    %138 = vmatprep.subr.mxu0 0.0
    %139 = vmatpush1.msra.mxu0 0.0
    %140 = vmatprep.subr.mxu0 0.0
    %141 = vmatpush1.msra.mxu0 0.0
    %142 = vmatprep.subr.mxu0 0.0
    %143 = vmatpush1.msra.mxu0 0.0
    %144 = vmatprep.subr.mxu0 0.0
    %145 = vmatpush1.msra.mxu0 0.0
    %146 = vmatprep.subr.mxu0 0.0
    %147 = vmatpush1.msra.mxu0 0.0
    %148 = vmatprep.subr.mxu0 0.0
    %149 = vmatpush1.msra.mxu0 0.0
    %150 = vmatprep.mubr.f32.mxu0 0.0
    %151 = vmatmul.mubr.f32.gmra.mrb[0].mxu0 %v84
    %v152 = vpop.f32.mrb[0].mxu0
    %v153 = vadd.f32 %v80, %v152
    %v154 = vpop.f32.mrb[0].mxu0
    %155 = vdwg.mxu0
    %vm156 = vcmask 811008
    %157 = vst.msk [vmem:[#allocation2] sm:$0x1] %vm156, %v153
    %vm158 = vcmask 812033
    %159 = vst.msk [vmem:[#allocation3 - $0x1] sm:$0x2] %vm158, %v153
    %s160 = scalar_lea.vmem [#allocation4], 32
    %v161 = vld [vmem:[%s160] sm:$0xff]
    %v162 = vld [vmem:[%s160 + $0x8] sm:$0xff]
    %v163 = vld [vmem:[%s160 + $0x10] sm:$0xff]
    %v164 = vld [vmem:[%s160 + $0x18] sm:$0xff]
    %165 = vmatprep.subr.mxu0 0.0
    %166 = vmatpush1.msra.mxu0 %v161
    %167 = vmatprep.subr.mxu0 0.0
    %168 = vmatpush1.msra.mxu0 %v162
    %169 = vmatprep.subr.mxu0 0.0
    %170 = vmatpush1.msra.mxu0 %v163
    %171 = vmatprep.subr.mxu0 0.0
    %172 = vmatpush1.msra.mxu0 %v164
    %173 = vmatprep.subr.mxu0 0.0
    %174 = vmatpush1.msra.mxu0 0.0
    %175 = vmatprep.subr.mxu0 0.0
    %176 = vmatpush1.msra.mxu0 0.0
    %177 = vmatprep.subr.mxu0 0.0
    %178 = vmatpush1.msra.mxu0 0.0
    %179 = vmatprep.subr.mxu0 0.0
    %180 = vmatpush1.msra.mxu0 0.0
    %181 = vmatprep.subr.mxu0 0.0
    %182 = vmatpush1.msra.mxu0 0.0
    %183 = vmatprep.subr.mxu0 0.0
    %184 = vmatpush1.msra.mxu0 0.0
    %185 = vmatprep.subr.mxu0 0.0
    %186 = vmatpush1.msra.mxu0 0.0
    %187 = vmatprep.subr.mxu0 0.0
    %188 = vmatpush1.msra.mxu0 0.0
    %189 = vmatprep.subr.mxu0 0.0
    %190 = vmatpush1.msra.mxu0 0.0
    %191 = vmatprep.subr.mxu0 0.0
    %192 = vmatpush1.msra.mxu0 0.0
    %193 = vmatprep.subr.mxu0 0.0
    %194 = vmatpush1.msra.mxu0 0.0
    %195 = vmatprep.subr.mxu0 0.0
    %196 = vmatpush1.msra.mxu0 0.0
    %197 = vmatprep.subr.mxu0 0.0
    %198 = vmatpush1.msra.mxu0 0.0
    %199 = vmatprep.subr.mxu0 0.0
    %200 = vmatpush1.msra.mxu0 0.0
    %201 = vmatprep.subr.mxu0 0.0
    %202 = vmatpush1.msra.mxu0 0.0
    %203 = vmatprep.subr.mxu0 0.0
    %204 = vmatpush1.msra.mxu0 0.0
    %205 = vmatprep.subr.mxu0 0.0
    %206 = vmatpush1.msra.mxu0 0.0
    %207 = vmatprep.subr.mxu0 0.0
    %208 = vmatpush1.msra.mxu0 0.0
    %209 = vmatprep.subr.mxu0 0.0
    %210 = vmatpush1.msra.mxu0 0.0
    %211 = vmatprep.subr.mxu0 0.0
    %212 = vmatpush1.msra.mxu0 0.0
    %213 = vmatprep.subr.mxu0 0.0
    %214 = vmatpush1.msra.mxu0 0.0
    %215 = vmatprep.subr.mxu0 0.0
    %216 = vmatpush1.msra.mxu0 0.0
    %217 = vmatprep.subr.mxu0 0.0
    %218 = vmatpush1.msra.mxu0 0.0
    %219 = vmatprep.subr.mxu0 0.0
    %220 = vmatpush1.msra.mxu0 0.0
    %221 = vmatprep.subr.mxu0 0.0
    %222 = vmatpush1.msra.mxu0 0.0
    %223 = vmatprep.subr.mxu0 0.0
    %224 = vmatpush1.msra.mxu0 0.0
    %225 = vmatprep.subr.mxu0 0.0
    %226 = vmatpush1.msra.mxu0 0.0
    %227 = vmatprep.subr.mxu0 0.0
    %228 = vmatpush1.msra.mxu0 0.0
    %229 = vmatprep.mubr.f32.mxu0 0.0
    %230 = vmatmul.mubr.f32.gmra.mrb[0].mxu0 %v84
    %v231 = vpop.f32.mrb[0].mxu0
    %v232 = vadd.f32 %v80, %v231
    %v233 = vpop.f32.mrb[0].mxu0
    %234 = vdwg.mxu0
    %235 = vst.msk [vmem:[#allocation2 + $0x1] sm:$0x1] %vm156, %v232
    %236 = vst.msk [vmem:[#allocation3] sm:$0x2] %vm158, %v232
    %v237 = vld [vmem:[#allocation2] sm:$0x3]
    %vm238 = vcmask 812032
    %v239 = vsel %vm238, %v237, 0.0
    %240 = vadd.xlane.f32.xlu0 %v239
    %v241 = vpop.xlane.xlu0 %240
    %vm242 = vcmask 1041408
    %v243 = vsel %vm242, %v241, 0.0
    %v244 = vrot.slane %v243, 4
    %v245 = vadd.f32 %v243, %v244
    %v246 = vrot.slane %v245, 2
    %v247 = vadd.f32 %v245, %v246
    %v248 = vrot.slane %v247, 1
    %v249 = vadd.f32 %v247, %v248
    %v250 = vrcp.pop 200.0
    %v251 = vmul.f32 %v249, %v250
    %v252 = vsub.f32 %v237, %v251
    %v253 = vmul.f32 %v252, %v252
    %v254 = vsel %vm238, %v253, 0.0
    %255 = vadd.xlane.f32.xlu0 %v254
    %v256 = vpop.xlane.xlu0 %255
    %v257 = vsel %vm242, %v256, 0.0
    %v258 = vrot.slane %v257, 4
    %v259 = vadd.f32 %v257, %v258
    %v260 = vrot.slane %v259, 2
    %v261 = vadd.f32 %v259, %v260
    %v262 = vrot.slane %v261, 1
    %v263 = vadd.f32 %v261, %v262
    %v264 = vmul.f32 %v263, %v250
    %v265 = vld [vmem:[%s3] sm:$0x1]
    %v266 = vld [vmem:[%s4] sm:$0x1]
    %v267 = vadd.f32 %v264, 1e-05
    %v268 = vrsqrt.pop %v267
    %v269 = vmul.f32 %v252, %v268
    %s271 = vtos %v265
    %v272 = vstv %s271
    %v274 = vmul.f32 %v269, %v272
    %s276 = vtos %v266
    %v277 = vstv %s276
    %v279 = vadd.f32 %v274, %v277
    %v280 = vmax.f32 %v279, 0.0
    %v281 = vld [vmem:[#allocation3] sm:$0x3]
    %v282 = vsel %vm238, %v281, 0.0
    %283 = vadd.xlane.f32.xlu0 %v282
    %v284 = vpop.xlane.xlu0 %283
    %v285 = vsel %vm242, %v284, 0.0
    %v286 = vrot.slane %v285, 4
    %v287 = vadd.f32 %v285, %v286
    %v288 = vrot.slane %v287, 2
    %v289 = vadd.f32 %v287, %v288
    %v290 = vrot.slane %v289, 1
    %v291 = vadd.f32 %v289, %v290
    %v292 = vmul.f32 %v291, %v250
    %v293 = vsub.f32 %v281, %v292
    %v294 = vmul.f32 %v293, %v293
    %v295 = vsel %vm238, %v294, 0.0
    %296 = vadd.xlane.f32.xlu0 %v295
    %v297 = vpop.xlane.xlu0 %296
    %v298 = vsel %vm242, %v297, 0.0
    %v299 = vrot.slane %v298, 4
    %v300 = vadd.f32 %v298, %v299
    %v301 = vrot.slane %v300, 2
    %v302 = vadd.f32 %v300, %v301
    %v303 = vrot.slane %v302, 1
    %v304 = vadd.f32 %v302, %v303
    %v305 = vmul.f32 %v304, %v250
    %v306 = vld [vmem:[%s3 + $0x1] sm:$0x1]
    %v307 = vld [vmem:[%s4 + $0x1] sm:$0x1]
    %v308 = vadd.f32 %v305, 1e-05
    %v309 = vrsqrt.pop %v308
    %v310 = vmul.f32 %v293, %v309
    %s312 = vtos %v306
    %v313 = vstv %s312
    %v315 = vmul.f32 %v310, %v313
    %s317 = vtos %v307
    %v318 = vstv %s317
    %v320 = vadd.f32 %v315, %v318
    %v321 = vmax.f32 %v320, 0.0
    %v322 = vld [vmem:[#allocation7] sm:$0xff]
    %v323 = vld [vmem:[#allocation7 + $0x8] sm:$0xff]
    %v324 = vld [vmem:[#allocation7 + $0x10] sm:$0xff]
    %v325 = vld [vmem:[#allocation7 + $0x18] sm:$0xff]
    %v326 = vld [vmem:[#allocation7 + $0x20] sm:$0xff]
    %v327 = vld [vmem:[#allocation7 + $0x28] sm:$0xff]
    %v328 = vld [vmem:[#allocation7 + $0x30] sm:$0xff]
    %v329 = vld [vmem:[#allocation7 + $0x38] sm:$0xff]
    %v330 = vld [vmem:[#allocation7 + $0x40] sm:$0xff]
    %v331 = vld [vmem:[#allocation7 + $0x48] sm:$0xff]
    %v332 = vld [vmem:[#allocation7 + $0x50] sm:$0xff]
    %v333 = vld [vmem:[#allocation7 + $0x58] sm:$0xff]
    %v334 = vld [vmem:[#allocation7 + $0x60] sm:$0xff]
    %v335 = vld [vmem:[#allocation7 + $0x68] sm:$0xff]
    %v336 = vld [vmem:[#allocation7 + $0x70] sm:$0xff]
    %v337 = vld [vmem:[#allocation7 + $0x78] sm:$0xff]
    %v338 = vld [vmem:[#allocation7 + $0x80] sm:$0xff]
    %v339 = vld [vmem:[#allocation7 + $0x88] sm:$0xff]
    %v340 = vld [vmem:[#allocation7 + $0x90] sm:$0xff]
    %v341 = vld [vmem:[#allocation7 + $0x98] sm:$0xff]
    %v342 = vld [vmem:[#allocation7 + $0xa0] sm:$0xff]
    %v343 = vld [vmem:[#allocation7 + $0xa8] sm:$0xff]
    %v344 = vld [vmem:[#allocation7 + $0xb0] sm:$0xff]
    %v345 = vld [vmem:[#allocation7 + $0xb8] sm:$0xff]
    %v346 = vld [vmem:[#allocation7 + $0xc0] sm:$0xff]
    %v347 = vld [vmem:[#allocation7 + $0xc8] sm:$0xff]
    %v348 = vld [vmem:[#allocation7 + $0xd0] sm:$0xff]
    %v349 = vld [vmem:[#allocation7 + $0xd8] sm:$0xff]
    %v350 = vld [vmem:[#allocation7 + $0xe0] sm:$0xff]
    %v351 = vld [vmem:[#allocation7 + $0xe8] sm:$0xff]
    %v352 = vld [vmem:[#allocation7 + $0xf0] sm:$0xff]
    %v353 = vld [vmem:[#allocation7 + $0xf8] sm:$0xff]
    %v354 = vld [vmem:[#allocation7 + $0x100] sm:$0xff]
    %v355 = vld [vmem:[#allocation7 + $0x108] sm:$0xff]
    %v356 = vld [vmem:[#allocation7 + $0x110] sm:$0xff]
    %v357 = vld [vmem:[#allocation7 + $0x118] sm:$0xff]
    %v358 = vld [vmem:[#allocation7 + $0x120] sm:$0xff]
    %v359 = vld [vmem:[#allocation7 + $0x128] sm:$0xff]
    %v360 = vld [vmem:[#allocation7 + $0x130] sm:$0xff]
    %v361 = vld [vmem:[#allocation7 + $0x138] sm:$0xff]
    %v362 = vld [vmem:[#allocation7 + $0x140] sm:$0xff]
    %v363 = vld [vmem:[#allocation7 + $0x148] sm:$0xff]
    %v364 = vld [vmem:[#allocation7 + $0x150] sm:$0xff]
    %v365 = vld [vmem:[#allocation7 + $0x158] sm:$0xff]
    %v366 = vld [vmem:[#allocation7 + $0x160] sm:$0xff]
    %v367 = vld [vmem:[#allocation7 + $0x168] sm:$0xff]
    %v368 = vld [vmem:[#allocation7 + $0x170] sm:$0xff]
    %v369 = vld [vmem:[#allocation7 + $0x178] sm:$0xff]
    %v370 = vld [vmem:[#allocation7 + $0x180] sm:$0xff]
    %v371 = vld [vmem:[#allocation7 + $0x188] sm:$0xff]
    %v372 = vld [vmem:[#allocation7 + $0x190] sm:$0xff]
    %v373 = vld [vmem:[#allocation7 + $0x198] sm:$0xff]
    %v374 = vld [vmem:[#allocation7 + $0x1a0] sm:$0xff]
    %v375 = vld [vmem:[#allocation7 + $0x1a8] sm:$0xff]
    %v376 = vld [vmem:[#allocation7 + $0x1b0] sm:$0xff]
    %v377 = vld [vmem:[#allocation7 + $0x1b8] sm:$0xff]
    %v378 = vld [vmem:[#allocation7 + $0x1c0] sm:$0xff]
    %v379 = vld [vmem:[#allocation7 + $0x1c8] sm:$0xff]
    %v380 = vld [vmem:[#allocation7 + $0x1d0] sm:$0xff]
    %v381 = vld [vmem:[#allocation7 + $0x1d8] sm:$0xff]
    %v382 = vld [vmem:[#allocation7 + $0x1e0] sm:$0xf]
    %v383 = vld [vmem:[#allocation7 + $0x1e8] sm:$0xf]
    %v384 = vld [vmem:[#allocation7 + $0x1f0] sm:$0xf]
    %v385 = vld [vmem:[#allocation7 + $0x1f8] sm:$0xf]
    %v386 = vld [vmem:[#allocation7 + $0x200] sm:$0xf]
    %v387 = vld [vmem:[#allocation9] sm:$0xff]
    %v388 = vld [vmem:[#allocation9 + $0x8] sm:$0xff]
    %v389 = vld [vmem:[#allocation9 + $0x10] sm:$0xff]
    %v390 = vld [vmem:[#allocation9 + $0x18] sm:$0xff]
    %v391 = vld [vmem:[#allocation9 + $0x20] sm:$0xff]
    %v392 = vld [vmem:[#allocation9 + $0x28] sm:$0xff]
    %v393 = vld [vmem:[#allocation9 + $0x30] sm:$0xff]
    %v394 = vld [vmem:[#allocation9 + $0x38] sm:$0xff]
    %v395 = vld [vmem:[#allocation9 + $0x40] sm:$0xff]
    %v396 = vld [vmem:[#allocation9 + $0x48] sm:$0xff]
    %v397 = vld [vmem:[#allocation9 + $0x50] sm:$0xff]
    %v398 = vld [vmem:[#allocation9 + $0x58] sm:$0xff]
    %v399 = vld [vmem:[#allocation9 + $0x60] sm:$0xff]
    %v400 = vld [vmem:[#allocation9 + $0x68] sm:$0xff]
    %v401 = vld [vmem:[#allocation9 + $0x70] sm:$0xff]
    %v402 = vld [vmem:[#allocation9 + $0x78] sm:$0xff]
    %v403 = vld [vmem:[#allocation9 + $0x80] sm:$0xff]
    %v404 = vld [vmem:[#allocation9 + $0x88] sm:$0xff]
    %v405 = vld [vmem:[#allocation9 + $0x90] sm:$0xff]
    %v406 = vld [vmem:[#allocation9 + $0x98] sm:$0xff]
    %v407 = vld [vmem:[#allocation9 + $0xa0] sm:$0xff]
    %v408 = vld [vmem:[#allocation9 + $0xa8] sm:$0xff]
    %v409 = vld [vmem:[#allocation9 + $0xb0] sm:$0xff]
    %v410 = vld [vmem:[#allocation9 + $0xb8] sm:$0xff]
    %v411 = vld [vmem:[#allocation9 + $0xc0] sm:$0xff]
    %v412 = vld [vmem:[#allocation9 + $0xc8] sm:$0xff]
    %v413 = vld [vmem:[#allocation9 + $0xd0] sm:$0xff]
    %v414 = vld [vmem:[#allocation9 + $0xd8] sm:$0xff]
    %v415 = vld [vmem:[#allocation9 + $0xe0] sm:$0xff]
    %v416 = vld [vmem:[#allocation9 + $0xe8] sm:$0xff]
    %v417 = vld [vmem:[#allocation9 + $0xf0] sm:$0xff]
    %v418 = vld [vmem:[#allocation9 + $0xf8] sm:$0xff]
    %v419 = vld [vmem:[#allocation9 + $0x100] sm:$0xff]
    %v420 = vld [vmem:[#allocation9 + $0x108] sm:$0xff]
    %v421 = vld [vmem:[#allocation9 + $0x110] sm:$0xff]
    %v422 = vld [vmem:[#allocation9 + $0x118] sm:$0xff]
    %v423 = vld [vmem:[#allocation9 + $0x120] sm:$0xff]
    %v424 = vld [vmem:[#allocation9 + $0x128] sm:$0xff]
    %v425 = vld [vmem:[#allocation9 + $0x130] sm:$0xff]
    %v426 = vld [vmem:[#allocation9 + $0x138] sm:$0xff]
    %v427 = vld [vmem:[#allocation9 + $0x140] sm:$0xff]
    %v428 = vld [vmem:[#allocation9 + $0x148] sm:$0xff]
    %v429 = vld [vmem:[#allocation9 + $0x150] sm:$0xff]
    %v430 = vld [vmem:[#allocation9 + $0x158] sm:$0xff]
    %v431 = vld [vmem:[#allocation9 + $0x160] sm:$0xff]
    %v432 = vld [vmem:[#allocation9 + $0x168] sm:$0xff]
    %v433 = vld [vmem:[#allocation9 + $0x170] sm:$0xff]
    %v434 = vld [vmem:[#allocation9 + $0x178] sm:$0xff]
    %v435 = vld [vmem:[#allocation9 + $0x180] sm:$0xff]
    %v436 = vld [vmem:[#allocation9 + $0x188] sm:$0xff]
    %v437 = vld [vmem:[#allocation9 + $0x190] sm:$0xff]
    %v438 = vld [vmem:[#allocation9 + $0x198] sm:$0xff]
    %v439 = vld [vmem:[#allocation9 + $0x1a0] sm:$0xff]
    %v440 = vld [vmem:[#allocation9 + $0x1a8] sm:$0xff]
    %v441 = vld [vmem:[#allocation9 + $0x1b0] sm:$0xff]
    %v442 = vld [vmem:[#allocation9 + $0x1b8] sm:$0xff]
    %v443 = vld [vmem:[#allocation9 + $0x1c0] sm:$0xff]
    %v444 = vld [vmem:[#allocation9 + $0x1c8] sm:$0xff]
    %v445 = vld [vmem:[#allocation9 + $0x1d0] sm:$0xff]
    %v446 = vld [vmem:[#allocation9 + $0x1d8] sm:$0xff]
    %v447 = vld [vmem:[#allocation9 + $0x1e0] sm:$0xf]
    %v448 = vld [vmem:[#allocation9 + $0x1e8] sm:$0xf]
    %v449 = vld [vmem:[#allocation9 + $0x1f0] sm:$0xf]
    %v450 = vld [vmem:[#allocation9 + $0x1f8] sm:$0xf]
    %v451 = vld [vmem:[#allocation9 + $0x200] sm:$0xf]
    %vm452 = vcmask 818176
    %v454 = vsel %vm452, %v321, 0
    %vm456 = vcmask 1043456
    %v458 = vsel %vm456, %v447, 0
    %v461 = vsel %vm456, %v448, 0
    %v464 = vsel %vm456, %v449, 0
    %v467 = vsel %vm456, %v450, 0
    %v470 = vsel %vm456, %v451, 0
    %472 = vmatprep.subr.mxu0 %v388
    %473 = vmatpush1.msra.mxu0 %v387
    %474 = vmatprep.subr.mxu0 %v393
    %475 = vmatpush1.msra.mxu0 %v392
    %476 = vmatprep.subr.mxu0 %v398
    %477 = vmatpush1.msra.mxu0 %v397
    %478 = vmatprep.subr.mxu0 %v403
    %479 = vmatpush1.msra.mxu0 %v402
    %480 = vmatprep.subr.mxu0 %v408
    %481 = vmatpush1.msra.mxu0 %v407
    %482 = vmatprep.subr.mxu0 %v413
    %483 = vmatpush1.msra.mxu0 %v412
    %484 = vmatprep.subr.mxu0 %v418
    %485 = vmatpush1.msra.mxu0 %v417
    %486 = vmatprep.subr.mxu0 %v423
    %487 = vmatpush1.msra.mxu0 %v422
    %488 = vmatprep.subr.mxu0 %v428
    %489 = vmatpush1.msra.mxu0 %v427
    %490 = vmatprep.subr.mxu0 %v433
    %491 = vmatpush1.msra.mxu0 %v432
    %492 = vmatprep.subr.mxu0 %v438
    %493 = vmatpush1.msra.mxu0 %v437
    %494 = vmatprep.subr.mxu0 %v443
    %495 = vmatpush1.msra.mxu0 %v442
    %496 = vmatprep.subr.mxu0 %v461
    %497 = vmatpush1.msra.mxu0 %v458
    %498 = vmatprep.subr.mxu0 0.0
    %499 = vmatpush1.msra.mxu0 0.0
    %500 = vmatprep.subr.mxu0 0.0
    %501 = vmatpush1.msra.mxu0 0.0
    %502 = vmatprep.subr.mxu0 0.0
    %503 = vmatpush1.msra.mxu0 0.0
    %504 = vmatprep.subr.mxu0 0.0
    %505 = vmatpush1.msra.mxu0 0.0
    %506 = vmatprep.subr.mxu0 0.0
    %507 = vmatpush1.msra.mxu0 0.0
    %508 = vmatprep.subr.mxu0 0.0
    %509 = vmatpush1.msra.mxu0 0.0
    %510 = vmatprep.subr.mxu0 0.0
    %511 = vmatpush1.msra.mxu0 0.0
    %512 = vmatprep.subr.mxu0 0.0
    %513 = vmatpush1.msra.mxu0 0.0
    %514 = vmatprep.subr.mxu0 0.0
    %515 = vmatpush1.msra.mxu0 0.0
    %516 = vmatprep.subr.mxu0 0.0
    %517 = vmatpush1.msra.mxu0 0.0
    %518 = vmatprep.subr.mxu0 0.0
    %519 = vmatpush1.msra.mxu0 0.0
    %520 = vmatprep.subr.mxu0 0.0
    %521 = vmatpush1.msra.mxu0 0.0
    %522 = vmatprep.subr.mxu0 0.0
    %523 = vmatpush1.msra.mxu0 0.0
    %524 = vmatprep.subr.mxu0 0.0
    %525 = vmatpush1.msra.mxu0 0.0
    %526 = vmatprep.subr.mxu0 0.0
    %527 = vmatpush1.msra.mxu0 0.0
    %528 = vmatprep.subr.mxu0 0.0
    %529 = vmatpush1.msra.mxu0 0.0
    %530 = vmatprep.subr.mxu0 0.0
    %531 = vmatpush1.msra.mxu0 0.0
    %532 = vmatprep.subr.mxu0 0.0
    %533 = vmatpush1.msra.mxu0 0.0
    %534 = vmatprep.subr.mxu0 0.0
    %535 = vmatpush1.msra.mxu0 0.0
    %536 = vmatprep.mubr.f32.mxu0 0.0
    %537 = vmatmul.mubr.f32.gmra.mrb[0].mxu0 %v454
    %v538 = vpop.f32.mrb[0].mxu0
    %v539 = vadd.f32 0.0, %v538
    %v540 = vpop.f32.mrb[0].mxu0
    %v541 = vadd.f32 0.0, %v540
    %542 = vdwg.mxu0
    %543 = vmatprep.subr.mxu0 %v390
    %544 = vmatpush1.msra.mxu0 %v389
    %545 = vmatprep.subr.mxu0 %v395
    %546 = vmatpush1.msra.mxu0 %v394
    %547 = vmatprep.subr.mxu0 %v400
    %548 = vmatpush1.msra.mxu0 %v399
    %549 = vmatprep.subr.mxu0 %v405
    %550 = vmatpush1.msra.mxu0 %v404
    %551 = vmatprep.subr.mxu0 %v410
    %552 = vmatpush1.msra.mxu0 %v409
    %553 = vmatprep.subr.mxu0 %v415
    %554 = vmatpush1.msra.mxu0 %v414
    %555 = vmatprep.subr.mxu0 %v420
    %556 = vmatpush1.msra.mxu0 %v419
    %557 = vmatprep.subr.mxu0 %v425
    %558 = vmatpush1.msra.mxu0 %v424
    %559 = vmatprep.subr.mxu0 %v430
    %560 = vmatpush1.msra.mxu0 %v429
    %561 = vmatprep.subr.mxu0 %v435
    %562 = vmatpush1.msra.mxu0 %v434
    %563 = vmatprep.subr.mxu0 %v440
    %564 = vmatpush1.msra.mxu0 %v439
    %565 = vmatprep.subr.mxu0 %v445
    %566 = vmatpush1.msra.mxu0 %v444
    %567 = vmatprep.subr.mxu0 %v467
    %568 = vmatpush1.msra.mxu0 %v464
    %569 = vmatprep.subr.mxu0 0.0
    %570 = vmatpush1.msra.mxu0 0.0
    %571 = vmatprep.subr.mxu0 0.0
    %572 = vmatpush1.msra.mxu0 0.0
    %573 = vmatprep.subr.mxu0 0.0
    %574 = vmatpush1.msra.mxu0 0.0
    %575 = vmatprep.subr.mxu0 0.0
    %576 = vmatpush1.msra.mxu0 0.0
    %577 = vmatprep.subr.mxu0 0.0
    %578 = vmatpush1.msra.mxu0 0.0
    %579 = vmatprep.subr.mxu0 0.0
    %580 = vmatpush1.msra.mxu0 0.0
    %581 = vmatprep.subr.mxu0 0.0
    %582 = vmatpush1.msra.mxu0 0.0
    %583 = vmatprep.subr.mxu0 0.0
    %584 = vmatpush1.msra.mxu0 0.0
    %585 = vmatprep.subr.mxu0 0.0
    %586 = vmatpush1.msra.mxu0 0.0
    %587 = vmatprep.subr.mxu0 0.0
    %588 = vmatpush1.msra.mxu0 0.0
    %589 = vmatprep.subr.mxu0 0.0
    %590 = vmatpush1.msra.mxu0 0.0
    %591 = vmatprep.subr.mxu0 0.0
    %592 = vmatpush1.msra.mxu0 0.0
    %593 = vmatprep.subr.mxu0 0.0
    %594 = vmatpush1.msra.mxu0 0.0
    %595 = vmatprep.subr.mxu0 0.0
    %596 = vmatpush1.msra.mxu0 0.0
    %597 = vmatprep.subr.mxu0 0.0
    %598 = vmatpush1.msra.mxu0 0.0
    %599 = vmatprep.subr.mxu0 0.0
    %600 = vmatpush1.msra.mxu0 0.0
    %601 = vmatprep.subr.mxu0 0.0
    %602 = vmatpush1.msra.mxu0 0.0
    %603 = vmatprep.subr.mxu0 0.0
    %604 = vmatpush1.msra.mxu0 0.0
    %605 = vmatprep.subr.mxu0 0.0
    %606 = vmatpush1.msra.mxu0 0.0
    %607 = vmatprep.mubr.f32.mxu0 0.0
    %608 = vmatmul.mubr.f32.gmra.mrb[0].mxu0 %v454
    %v609 = vpop.f32.mrb[0].mxu0
    %v610 = vadd.f32 0.0, %v609
    %v611 = vpop.f32.mrb[0].mxu0
    %v612 = vadd.f32 0.0, %v611
    %613 = vdwg.mxu0
    %614 = vmatprep.subr.mxu0 0.0
    %615 = vmatpush1.msra.mxu0 %v391
    %616 = vmatprep.subr.mxu0 0.0
    %617 = vmatpush1.msra.mxu0 %v396
    %618 = vmatprep.subr.mxu0 0.0
    %619 = vmatpush1.msra.mxu0 %v401
    %620 = vmatprep.subr.mxu0 0.0
    %621 = vmatpush1.msra.mxu0 %v406
    %622 = vmatprep.subr.mxu0 0.0
    %623 = vmatpush1.msra.mxu0 %v411
    %624 = vmatprep.subr.mxu0 0.0
    %625 = vmatpush1.msra.mxu0 %v416
    %626 = vmatprep.subr.mxu0 0.0
    %627 = vmatpush1.msra.mxu0 %v421
    %628 = vmatprep.subr.mxu0 0.0
    %629 = vmatpush1.msra.mxu0 %v426
    %630 = vmatprep.subr.mxu0 0.0
    %631 = vmatpush1.msra.mxu0 %v431
    %632 = vmatprep.subr.mxu0 0.0
    %633 = vmatpush1.msra.mxu0 %v436
    %634 = vmatprep.subr.mxu0 0.0
    %635 = vmatpush1.msra.mxu0 %v441
    %636 = vmatprep.subr.mxu0 0.0
    %637 = vmatpush1.msra.mxu0 %v446
    %638 = vmatprep.subr.mxu0 0.0
    %639 = vmatpush1.msra.mxu0 %v470
    %640 = vmatprep.subr.mxu0 0.0
    %641 = vmatpush1.msra.mxu0 0.0
    %642 = vmatprep.subr.mxu0 0.0
    %643 = vmatpush1.msra.mxu0 0.0
    %644 = vmatprep.subr.mxu0 0.0
    %645 = vmatpush1.msra.mxu0 0.0
    %646 = vmatprep.subr.mxu0 0.0
    %647 = vmatpush1.msra.mxu0 0.0
    %648 = vmatprep.subr.mxu0 0.0
    %649 = vmatpush1.msra.mxu0 0.0
    %650 = vmatprep.subr.mxu0 0.0
    %651 = vmatpush1.msra.mxu0 0.0
    %652 = vmatprep.subr.mxu0 0.0
    %653 = vmatpush1.msra.mxu0 0.0
    %654 = vmatprep.subr.mxu0 0.0
    %655 = vmatpush1.msra.mxu0 0.0
    %656 = vmatprep.subr.mxu0 0.0
    %657 = vmatpush1.msra.mxu0 0.0
    %658 = vmatprep.subr.mxu0 0.0
    %659 = vmatpush1.msra.mxu0 0.0
    %660 = vmatprep.subr.mxu0 0.0
    %661 = vmatpush1.msra.mxu0 0.0
    %662 = vmatprep.subr.mxu0 0.0
    %663 = vmatpush1.msra.mxu0 0.0
    %664 = vmatprep.subr.mxu0 0.0
    %665 = vmatpush1.msra.mxu0 0.0
    %666 = vmatprep.subr.mxu0 0.0
    %667 = vmatpush1.msra.mxu0 0.0
    %668 = vmatprep.subr.mxu0 0.0
    %669 = vmatpush1.msra.mxu0 0.0
    %670 = vmatprep.subr.mxu0 0.0
    %671 = vmatpush1.msra.mxu0 0.0
    %672 = vmatprep.subr.mxu0 0.0
    %673 = vmatpush1.msra.mxu0 0.0
    %674 = vmatprep.subr.mxu0 0.0
    %675 = vmatpush1.msra.mxu0 0.0
    %676 = vmatprep.subr.mxu0 0.0
    %677 = vmatpush1.msra.mxu0 0.0
    %678 = vmatprep.mubr.f32.mxu0 0.0
    %679 = vmatmul.mubr.f32.gmra.mrb[0].mxu0 %v454
    %v680 = vpop.f32.mrb[0].mxu0
    %v681 = vadd.f32 0.0, %v680
    %v682 = vpop.f32.mrb[0].mxu0
    %683 = vdwg.mxu0
    %v685 = vsel %vm452, %v280, 0
    %v688 = vsel %vm456, %v382, 0
    %v691 = vsel %vm456, %v383, 0
    %v694 = vsel %vm456, %v384, 0
    %v697 = vsel %vm456, %v385, 0
    %v700 = vsel %vm456, %v386, 0
    %702 = vmatprep.subr.mxu0 %v323
    %703 = vmatpush1.msra.mxu0 %v322
    %704 = vmatprep.subr.mxu0 %v328
    %705 = vmatpush1.msra.mxu0 %v327
    %706 = vmatprep.subr.mxu0 %v333
    %707 = vmatpush1.msra.mxu0 %v332
    %708 = vmatprep.subr.mxu0 %v338
    %709 = vmatpush1.msra.mxu0 %v337
    %710 = vmatprep.subr.mxu0 %v343
    %711 = vmatpush1.msra.mxu0 %v342
    %712 = vmatprep.subr.mxu0 %v348
    %713 = vmatpush1.msra.mxu0 %v347
    %714 = vmatprep.subr.mxu0 %v353
    %715 = vmatpush1.msra.mxu0 %v352
    %716 = vmatprep.subr.mxu0 %v358
    %717 = vmatpush1.msra.mxu0 %v357
    %718 = vmatprep.subr.mxu0 %v363
    %719 = vmatpush1.msra.mxu0 %v362
    %720 = vmatprep.subr.mxu0 %v368
    %721 = vmatpush1.msra.mxu0 %v367
    %722 = vmatprep.subr.mxu0 %v373
    %723 = vmatpush1.msra.mxu0 %v372
    %724 = vmatprep.subr.mxu0 %v378
    %725 = vmatpush1.msra.mxu0 %v377
    %726 = vmatprep.subr.mxu0 %v691
    %727 = vmatpush1.msra.mxu0 %v688
    %728 = vmatprep.subr.mxu0 0.0
    %729 = vmatpush1.msra.mxu0 0.0
    %730 = vmatprep.subr.mxu0 0.0
    %731 = vmatpush1.msra.mxu0 0.0
    %732 = vmatprep.subr.mxu0 0.0
    %733 = vmatpush1.msra.mxu0 0.0
    %734 = vmatprep.subr.mxu0 0.0
    %735 = vmatpush1.msra.mxu0 0.0
    %736 = vmatprep.subr.mxu0 0.0
    %737 = vmatpush1.msra.mxu0 0.0
    %738 = vmatprep.subr.mxu0 0.0
    %739 = vmatpush1.msra.mxu0 0.0
    %740 = vmatprep.subr.mxu0 0.0
    %741 = vmatpush1.msra.mxu0 0.0
    %742 = vmatprep.subr.mxu0 0.0
    %743 = vmatpush1.msra.mxu0 0.0
    %744 = vmatprep.subr.mxu0 0.0
    %745 = vmatpush1.msra.mxu0 0.0
    %746 = vmatprep.subr.mxu0 0.0
    %747 = vmatpush1.msra.mxu0 0.0
    %748 = vmatprep.subr.mxu0 0.0
    %749 = vmatpush1.msra.mxu0 0.0
    %750 = vmatprep.subr.mxu0 0.0
    %751 = vmatpush1.msra.mxu0 0.0
    %752 = vmatprep.subr.mxu0 0.0
    %753 = vmatpush1.msra.mxu0 0.0
    %754 = vmatprep.subr.mxu0 0.0
    %755 = vmatpush1.msra.mxu0 0.0
    %756 = vmatprep.subr.mxu0 0.0
    %757 = vmatpush1.msra.mxu0 0.0
    %758 = vmatprep.subr.mxu0 0.0
    %759 = vmatpush1.msra.mxu0 0.0
    %760 = vmatprep.subr.mxu0 0.0
    %761 = vmatpush1.msra.mxu0 0.0
    %762 = vmatprep.subr.mxu0 0.0
    %763 = vmatpush1.msra.mxu0 0.0
    %764 = vmatprep.subr.mxu0 0.0
    %765 = vmatpush1.msra.mxu0 0.0
    %766 = vmatprep.mubr.f32.mxu0 0.0
    %767 = vmatmul.mubr.f32.gmra.mrb[0].mxu0 %v685
    %v768 = vpop.f32.mrb[0].mxu0
    %v769 = vadd.f32 %v539, %v768
    %v770 = vpop.f32.mrb[0].mxu0
    %v771 = vadd.f32 %v541, %v770
    %772 = vdwg.mxu0
    %773 = vmatprep.subr.mxu0 %v325
    %774 = vmatpush1.msra.mxu0 %v324
    %775 = vmatprep.subr.mxu0 %v330
    %776 = vmatpush1.msra.mxu0 %v329
    %777 = vmatprep.subr.mxu0 %v335
    %778 = vmatpush1.msra.mxu0 %v334
    %779 = vmatprep.subr.mxu0 %v340
    %780 = vmatpush1.msra.mxu0 %v339
    %781 = vmatprep.subr.mxu0 %v345
    %782 = vmatpush1.msra.mxu0 %v344
    %783 = vmatprep.subr.mxu0 %v350
    %784 = vmatpush1.msra.mxu0 %v349
    %785 = vmatprep.subr.mxu0 %v355
    %786 = vmatpush1.msra.mxu0 %v354
    %787 = vmatprep.subr.mxu0 %v360
    %788 = vmatpush1.msra.mxu0 %v359
    %789 = vmatprep.subr.mxu0 %v365
    %790 = vmatpush1.msra.mxu0 %v364
    %791 = vmatprep.subr.mxu0 %v370
    %792 = vmatpush1.msra.mxu0 %v369
    %793 = vmatprep.subr.mxu0 %v375
    %794 = vmatpush1.msra.mxu0 %v374
    %795 = vmatprep.subr.mxu0 %v380
    %796 = vmatpush1.msra.mxu0 %v379
    %797 = vmatprep.subr.mxu0 %v697
    %798 = vmatpush1.msra.mxu0 %v694
    %799 = vmatprep.subr.mxu0 0.0
    %800 = vmatpush1.msra.mxu0 0.0
    %801 = vmatprep.subr.mxu0 0.0
    %802 = vmatpush1.msra.mxu0 0.0
    %803 = vmatprep.subr.mxu0 0.0
    %804 = vmatpush1.msra.mxu0 0.0
    %805 = vmatprep.subr.mxu0 0.0
    %806 = vmatpush1.msra.mxu0 0.0
    %807 = vmatprep.subr.mxu0 0.0
    %808 = vmatpush1.msra.mxu0 0.0
    %809 = vmatprep.subr.mxu0 0.0
    %810 = vmatpush1.msra.mxu0 0.0
    %811 = vmatprep.subr.mxu0 0.0
    %812 = vmatpush1.msra.mxu0 0.0
    %813 = vmatprep.subr.mxu0 0.0
    %814 = vmatpush1.msra.mxu0 0.0
    %815 = vmatprep.subr.mxu0 0.0
    %816 = vmatpush1.msra.mxu0 0.0
    %817 = vmatprep.subr.mxu0 0.0
    %818 = vmatpush1.msra.mxu0 0.0
    %819 = vmatprep.subr.mxu0 0.0
    %820 = vmatpush1.msra.mxu0 0.0
    %821 = vmatprep.subr.mxu0 0.0
    %822 = vmatpush1.msra.mxu0 0.0
    %823 = vmatprep.subr.mxu0 0.0
    %824 = vmatpush1.msra.mxu0 0.0
    %825 = vmatprep.subr.mxu0 0.0
    %826 = vmatpush1.msra.mxu0 0.0
    %827 = vmatprep.subr.mxu0 0.0
    %828 = vmatpush1.msra.mxu0 0.0
    %829 = vmatprep.subr.mxu0 0.0
    %830 = vmatpush1.msra.mxu0 0.0
    %831 = vmatprep.subr.mxu0 0.0
    %832 = vmatpush1.msra.mxu0 0.0
    %833 = vmatprep.subr.mxu0 0.0
    %834 = vmatpush1.msra.mxu0 0.0
    %835 = vmatprep.subr.mxu0 0.0
    %836 = vmatpush1.msra.mxu0 0.0
    %837 = vmatprep.mubr.f32.mxu0 0.0
    %838 = vmatmul.mubr.f32.gmra.mrb[0].mxu0 %v685
    %v839 = vpop.f32.mrb[0].mxu0
    %v840 = vadd.f32 %v610, %v839
    %v841 = vpop.f32.mrb[0].mxu0
    %v842 = vadd.f32 %v612, %v841
    %843 = vdwg.mxu0
    %844 = vmatprep.subr.mxu0 0.0
    %845 = vmatpush1.msra.mxu0 %v326
    %846 = vmatprep.subr.mxu0 0.0
    %847 = vmatpush1.msra.mxu0 %v331
    %848 = vmatprep.subr.mxu0 0.0
    %849 = vmatpush1.msra.mxu0 %v336
    %850 = vmatprep.subr.mxu0 0.0
    %851 = vmatpush1.msra.mxu0 %v341
    %852 = vmatprep.subr.mxu0 0.0
    %853 = vmatpush1.msra.mxu0 %v346
    %854 = vmatprep.subr.mxu0 0.0
    %855 = vmatpush1.msra.mxu0 %v351
    %856 = vmatprep.subr.mxu0 0.0
    %857 = vmatpush1.msra.mxu0 %v356
    %858 = vmatprep.subr.mxu0 0.0
    %859 = vmatpush1.msra.mxu0 %v361
    %860 = vmatprep.subr.mxu0 0.0
    %861 = vmatpush1.msra.mxu0 %v366
    %862 = vmatprep.subr.mxu0 0.0
    %863 = vmatpush1.msra.mxu0 %v371
    %864 = vmatprep.subr.mxu0 0.0
    %865 = vmatpush1.msra.mxu0 %v376
    %866 = vmatprep.subr.mxu0 0.0
    %867 = vmatpush1.msra.mxu0 %v381
    %868 = vmatprep.subr.mxu0 0.0
    %869 = vmatpush1.msra.mxu0 %v700
    %870 = vmatprep.subr.mxu0 0.0
    %871 = vmatpush1.msra.mxu0 0.0
    %872 = vmatprep.subr.mxu0 0.0
    %873 = vmatpush1.msra.mxu0 0.0
    %874 = vmatprep.subr.mxu0 0.0
    %875 = vmatpush1.msra.mxu0 0.0
    %876 = vmatprep.subr.mxu0 0.0
    %877 = vmatpush1.msra.mxu0 0.0
    %878 = vmatprep.subr.mxu0 0.0
    %879 = vmatpush1.msra.mxu0 0.0
    %880 = vmatprep.subr.mxu0 0.0
    %881 = vmatpush1.msra.mxu0 0.0
    %882 = vmatprep.subr.mxu0 0.0
    %883 = vmatpush1.msra.mxu0 0.0
    %884 = vmatprep.subr.mxu0 0.0
    %885 = vmatpush1.msra.mxu0 0.0
    %886 = vmatprep.subr.mxu0 0.0
    %887 = vmatpush1.msra.mxu0 0.0
    %888 = vmatprep.subr.mxu0 0.0
    %889 = vmatpush1.msra.mxu0 0.0
    %890 = vmatprep.subr.mxu0 0.0
    %891 = vmatpush1.msra.mxu0 0.0
    %892 = vmatprep.subr.mxu0 0.0
    %893 = vmatpush1.msra.mxu0 0.0
    %894 = vmatprep.subr.mxu0 0.0
    %895 = vmatpush1.msra.mxu0 0.0
    %896 = vmatprep.subr.mxu0 0.0
    %897 = vmatpush1.msra.mxu0 0.0
    %898 = vmatprep.subr.mxu0 0.0
    %899 = vmatpush1.msra.mxu0 0.0
    %900 = vmatprep.subr.mxu0 0.0
    %901 = vmatpush1.msra.mxu0 0.0
    %902 = vmatprep.subr.mxu0 0.0
    %903 = vmatpush1.msra.mxu0 0.0
    %904 = vmatprep.subr.mxu0 0.0
    %905 = vmatpush1.msra.mxu0 0.0
    %906 = vmatprep.subr.mxu0 0.0
    %907 = vmatpush1.msra.mxu0 0.0
    %908 = vmatprep.mubr.f32.mxu0 0.0
    %909 = vmatmul.mubr.f32.gmra.mrb[0].mxu0 %v685
    %v910 = vpop.f32.mrb[0].mxu0
    %v911 = vadd.f32 %v681, %v910
    %v912 = vpop.f32.mrb[0].mxu0
    %913 = vdwg.mxu0
    %v914 = vld [vmem:[%s7] sm:$0x1f]
    %v916 = vlaneseq
    %v917 = vshrl.u32 %v916, 7
    %v918 = vsub.s32 0, %v917
    %v919 = vrot.slane %v914, %v918
    %v920 = vlaneseq
    %v921 = vshrl.u32 %v920, 7
    %v922 = vsub.s32 1, %v921
    %v923 = vrot.slane %v914, %v922
    %v924 = vlaneseq
    %v925 = vshrl.u32 %v924, 7
    %v926 = vsub.s32 2, %v925
    %v927 = vrot.slane %v914, %v926
    %v928 = vlaneseq
    %v929 = vshrl.u32 %v928, 7
    %v930 = vsub.s32 3, %v929
    %v931 = vrot.slane %v914, %v930
    %v932 = vlaneseq
    %v933 = vshrl.u32 %v932, 7
    %v934 = vsub.s32 4, %v933
    %v935 = vrot.slane %v914, %v934
    %v941 = vadd.f32 %v769, %v919
    %v942 = vadd.f32 %v771, %v923
    %v943 = vadd.f32 %v840, %v927
    %v944 = vadd.f32 %v842, %v931
    %v945 = vadd.f32 %v911, %v935
    %v946 = vsel %vm242, %v941, -inf
    %v947 = vsel %vm242, %v942, -inf
    %v948 = vsel %vm242, %v943, -inf
    %v949 = vsel %vm242, %v944, -inf
    %vm950 = vcmask 467968
    %v951 = vsel %vm950, %v945, -inf
    %v952 = vmax.f32 %v946, %v951
    %v953 = vmax.f32 %v952, %v947
    %v954 = vmax.f32 %v948, %v949
    %v955 = vmax.f32 %v953, %v954
    %956 = vmax.xlane.f32.xlu0 %v955
    %v957 = vpop.xlane.xlu0 %956
    %v958 = vsub.f32 %v941, %v957
    %v959 = vsub.f32 %v942, %v957
    %v960 = vsub.f32 %v943, %v957
    %v961 = vsub.f32 %v944, %v957
    %v962 = vsub.f32 %v945, %v957
    %v963 = vmul.f32 %v958, 1.442695
    %v964 = vpow.pop %v963
    %v965 = vmul.f32 %v959, 1.442695
    %v966 = vpow.pop %v965
    %v967 = vmul.f32 %v960, 1.442695
    %v968 = vpow.pop %v967
    %v969 = vmul.f32 %v961, 1.442695
    %v970 = vpow.pop %v969
    %v971 = vmul.f32 %v962, 1.442695
    %v972 = vpow.pop %v971
    %v973 = vsel %vm242, %v964, 0.0
    %v974 = vsel %vm242, %v966, 0.0
    %v975 = vadd.f32 %v973, %v974
    %v976 = vsel %vm242, %v968, 0.0
    %v977 = vadd.f32 %v975, %v976
    %v978 = vsel %vm242, %v970, 0.0
    %v979 = vadd.f32 %v977, %v978
    %v980 = vsel %vm950, %v972, 0.0
    %v981 = vadd.f32 %v979, %v980
    %982 = vadd.xlane.f32.xlu0 %v981
    %v983 = vpop.xlane.xlu0 %982
    %v984 = vrcp.pop %v983
    %v985 = vmul.f32 %v964, %v984
    %v986 = vmul.f32 %v966, %v984
    %v987 = vmul.f32 %v968, %v984
    %v988 = vmul.f32 %v970, %v984
    %v989 = vmul.f32 %v972, %v984
    %v995 = vcombine.low %v985, %v986
    %v996 = vcombine.low %v987, %v988
    %v998 = vunpack.c.l.s4 1983009808
    %v999 = vunpack.c.0.s8 %v998
    %v1000 = vlaneseq
    %v1001 = vshrl.u32 %v1000, 7
    %v1002 = vsub.s32 %v999, %v1001
    %v1003 = vrot.slane %v995, %v1002
    %v1005 = vunpack.c.l.s4 1983009808
    %v1006 = vunpack.c.0.s8 %v1005
    %v1007 = vlaneseq
    %v1008 = vshrl.u32 %v1007, 7
    %v1009 = vsub.s32 %v1006, %v1008
    %v1010 = vrot.slane %v996, %v1009
    %v1011 = vcombine.low %v1003, %v1010
    %v1013 = vunpack.c.l.s4 1983009808
    %v1014 = vunpack.c.0.s8 %v1013
    %v1015 = vlaneseq
    %v1016 = vshrl.u32 %v1015, 7
    %v1017 = vsub.s32 %v1014, %v1016
    %v1018 = vrot.slane %v989, %v1017
    %1021 = vst [vmem:[#allocation10] sm:$0xff] %v1011
    %1022 = vst.msk [vmem:[#allocation10 + $0x8] sm:$0x3] %vm950, %v1018
    // Predicated region
    $region46: #{tpu_custom_call.1} parent=1 // pred_check
      _
    $region47: #{tpu_custom_call.1} parent=1 // pred_check_branch
      %1024 = sbr.rel (0) target = $region49
    $region48: #{tpu_custom_call.1} parent=1 // pred_region
      %s1026 = ssub.s32 160, 160
      %1027 = vsyncadd [#allocation6], %s1026
      %s1029 = sshll.u32 [#allocation10], 4
      %s1030 = int_to_ptr.vmem [resolvable:$true] %s1029
      %1032 = dma.vmem_to_hbm [thread:$0]  %s1030, 160, %s8, [#allocation6]
    $region49: #{tpu_custom_call.1} parent=1 // pred_fallthru
      _
    // Predicated region
    $region50: #{tpu_custom_call.1} parent=1 // pred_check
      _
    $region51: #{tpu_custom_call.1} parent=1 // pred_check_branch
      %1034 = sbr.rel (0) target = $region53
    $region52: #{tpu_custom_call.1} parent=1 // pred_region
      %1035 = dma.done [#allocation6], 160
    $region53: #{tpu_custom_call.1} parent=1 // pred_fallthru
      _
    %1036 = vsyncpa [#allocation5], 1
    %1037 = vsyncpa [#allocation8], 1
    %1038 = vsyncpa [#allocation6], 1

</llo_original>
